<compile_context>
chip_gen: v5e
topology: v5e:2x2
jax: 0.10.0
libtpu: 0.0.40
codegen_flags: <defaults>
</compile_context>

<pallas_src>
import jax
import jax.numpy as jnp
from jax.experimental import pallas as pl
from jax.experimental.pallas import tpu as pltpu


def _round_up(x, m):
    return (x + m - 1) // m * m


def _linear_kernel(x_ref, w_ref, b_ref, o_ref):
    # x_ref: (TN, D)   w_ref: (D, TC)   b_ref: (1, TC)   o_ref: (TN, TC)
    acc = jnp.dot(x_ref[...], w_ref[...], preferred_element_type=jnp.float32)
    o_ref[...] = (acc + b_ref[...]).astype(o_ref.dtype)


def feat_classifier_forward(x, w_t, bias, *, tile_n=None, tile_c=512):
    """Linear classifier head: x @ W^T + b.

    x:    (N, D)
    w_t:  (D, C)   PyTorch weight (C, D) pre-transposed once at init time.
    bias: (C,)
    """
    N, D = x.shape
    Dw, C = w_t.shape
    assert Dw == D, (Dw, D)
    itemsize = jnp.dtype(x.dtype).itemsize
    b2 = bias.reshape(1, C)

    vmem_budget = 24 * 1024 * 1024   # headroom under the 32 MiB scoped default (all gens)

    def lanes(c):                    # lane-padded width a VMEM tile actually occupies
        return _round_up(max(c, 128), 128)

    # ---- class-dim tiling ----------------------------------------------------------
    # Small C: one block spanning the whole class dim; constant index_map => the weight
    # is DMA'd once and stays resident.  Large C: lane-aligned class tiles on a second
    # grid axis so DMAs stay big instead of shrinking the row tile.
    if C <= max(tile_c, 128) and D * lanes(C) * itemsize <= vmem_budget // 2:
        tile_c, nc = C, 1
    else:
        tile_c = min(_round_up(tile_c, 128), _round_up(C, 128))
        nc = pl.cdiv(C, tile_c)

    # ---- row (batch) tiling --------------------------------------------------------
    if tile_n is None:
        tile_n = 2048
    tile_n = _round_up(min(tile_n, _round_up(N, 8)), 8)
    # keep >= 4 row-steps on large inputs so both v7x TensorCores get work
    min_steps = 4
    if N >= min_steps * 256:
        tile_n = min(tile_n, _round_up(pl.cdiv(N, min_steps), 8))

    # ---- fit the tiles inside the VMEM budget ----------------------------------------
    def vmem_bytes(tn, tc, resident):
        w_mult = 1 if resident else 2          # resident weight: single copy; tiled: double-buffered
        return (2 * tn * _round_up(D, 128) * itemsize    # x tile (double buffered)
                + 2 * tn * lanes(tc) * itemsize          # out tile (double buffered)
                + w_mult * D * lanes(tc) * itemsize      # weight block
                + w_mult * lanes(tc) * itemsize)         # bias block

    while vmem_bytes(tile_n, tile_c, nc == 1) > vmem_budget:
        if tile_n > 256:
            tile_n = _round_up(tile_n // 2, 8)
        elif nc > 1 and tile_c > 128:
            tile_c = _round_up(tile_c // 2, 128)
            nc = pl.cdiv(C, tile_c)
        elif tile_n > 8:
            tile_n = _round_up(tile_n // 2, 8)
        else:
            break

    # C axis innermost => the x row tile stays resident while class tiles stream.
    grid = (pl.cdiv(N, tile_n), nc)

    cost = pl.CostEstimate(
        flops=2 * N * D * C,
        transcendentals=0,
        bytes_accessed=(N * D + D * C + C + N * C) * itemsize,
    )

    return pl.pallas_call(
        _linear_kernel,
        out_shape=jax.ShapeDtypeStruct((N, C), x.dtype),
        grid_spec=pltpu.PrefetchScalarGridSpec(
            num_scalar_prefetch=0,
            grid=grid,
            in_specs=[
                pl.BlockSpec((tile_n, D), lambda i, j: (i, 0)),   # x row tile
                pl.BlockSpec((D, tile_c), lambda i, j: (0, j)),   # weight (resident when nc==1)
                pl.BlockSpec((1, tile_c), lambda i, j: (0, j)),   # bias
            ],
            out_specs=pl.BlockSpec((tile_n, tile_c), lambda i, j: (i, j)),
        ),
        compiler_params=pltpu.CompilerParams(
            dimension_semantics=("parallel", "parallel"),
            vmem_limit_bytes=32 * 1024 * 1024,
        ),
        cost_estimate=cost,
    )(x, w_t, b2)


def init_linear_params(key, class_num, bottleneck_dim):
    """Match PyTorch init_weights for Linear: xavier_normal_(weight), zeros_(bias).

    Returns the weight already transposed to (D, C) so no per-call transpose is needed.
    """
    std = (2.0 / (class_num + bottleneck_dim)) ** 0.5
    weight = std * jax.random.normal(key, (class_num, bottleneck_dim), jnp.float32)
    bias = jnp.zeros((class_num,), jnp.float32)
    return weight.T, bias   # (D, C), (C,)


if __name__ == "__main__":
    class_num = 16
    bottleneck_dim = 256
    batch = 8

    key = jax.random.PRNGKey(0)
    k_x, k_w, k_x2, k_w2, k_b2 = jax.random.split(key, 5)

    # --- shapes matching the module defaults (class_num=16, bottleneck_dim=256) ---
    x = jax.random.normal(k_x, (batch, bottleneck_dim), jnp.float32)
    w_t, bias = init_linear_params(k_w, class_num, bottleneck_dim)

    out = jax.block_until_ready(feat_classifier_forward(x, w_t, bias))
    ref = x @ w_t + bias
    assert out.shape == (batch, class_num)
    assert jnp.allclose(out, ref, atol=1e-3, rtol=1e-3)

    # --- ragged row count: exercises the masked last N block (no wrapper padding) ---
    x2 = jax.random.normal(k_x2, (37, bottleneck_dim), jnp.float32)
    out2 = jax.block_until_ready(feat_classifier_forward(x2, w_t, bias))
    ref2 = x2 @ w_t + bias
    assert out2.shape == (37, class_num)
    assert jnp.allclose(out2, ref2, atol=1e-3, rtol=1e-3)

    # --- larger class count: exercises the class-dim grid axis with a ragged C tile ---
    C_big = 600
    w_big = 0.05 * jax.random.normal(k_w2, (bottleneck_dim, C_big), jnp.float32)
    b_big = 0.1 * jax.random.normal(k_b2, (C_big,), jnp.float32)
    out3 = jax.block_until_ready(feat_classifier_forward(x2, w_big, b_big))
    ref3 = x2 @ w_big + b_big
    assert out3.shape == (37, C_big)
    assert jnp.allclose(out3, ref3, atol=1e-3, rtol=1e-3)

    print("KERNEL_OK")
</pallas_src>

<mosaic_0001>
module attributes {stable_mosaic.version = 11 : i64} {
  func.func @_linear_kernel(%arg0: i32, %arg1: i32, %arg2: memref<8x256xf32, #tpu.memory_space<vmem>>, %arg3: memref<256x16xf32, #tpu.memory_space<vmem>>, %arg4: memref<1x16xf32, #tpu.memory_space<vmem>>, %arg5: memref<8x16xf32, #tpu.memory_space<vmem>>) attributes {dimension_semantics = [#tpu.dimension_semantics<parallel>, #tpu.dimension_semantics<parallel>], iteration_bounds = array<i64: 1, 1>, scalar_prefetch = 0 : i64, scratch_operands = 0 : i64, tpu.core_type = #tpu.core_type<tc>, window_params = [{transform_indices = @transform_0, window_bounds = array<i64: 8, 256>}, {transform_indices = @transform_1, window_bounds = array<i64: 256, 16>}, {transform_indices = @transform_2, window_bounds = array<i64: 1, 16>}, {transform_indices = @transform_3, window_bounds = array<i64: 8, 16>}]} {
    %c0 = arith.constant 0 : index
    %c0_0 = arith.constant 0 : index
    %0 = vector.load %arg2[%c0, %c0_0] : memref<8x256xf32, #tpu.memory_space<vmem>>, vector<8x256xf32>
    %c0_1 = arith.constant 0 : index
    %c0_2 = arith.constant 0 : index
    %1 = vector.load %arg3[%c0_1, %c0_2] : memref<256x16xf32, #tpu.memory_space<vmem>>, vector<256x16xf32>
    %cst = arith.constant dense<0.000000e+00> : vector<8x16xf32>
    %2 = tpu.matmul %0, %1, %cst {dimension_numbers = #tpu.dot_dimension_numbers<[1], [0], [0], [1], [0, 0, 1, 1], [], []>} : vector<8x256xf32>, vector<256x16xf32>, vector<8x16xf32> -> vector<8x16xf32>
    %c0_3 = arith.constant 0 : index
    %c0_4 = arith.constant 0 : index
    %3 = vector.load %arg4[%c0_3, %c0_4] : memref<1x16xf32, #tpu.memory_space<vmem>>, vector<1x16xf32>
    %4 = vector.broadcast %3 : vector<1x16xf32> to vector<8x16xf32>
    %5 = arith.addf %2, %4 : vector<8x16xf32>
    %c0_5 = arith.constant 0 : index
    %c0_6 = arith.constant 0 : index
    %6 = vector.load %arg5[%c0_5, %c0_6] : memref<8x16xf32, #tpu.memory_space<vmem>>, vector<8x16xf32>
    tpu.vector_store %arg5[%c0_5, %c0_6], %5 {strides = array<i32>} : memref<8x16xf32, #tpu.memory_space<vmem>>, vector<8x16xf32>,
    return
  }
  func.func @transform_0(%arg0: i32, %arg1: i32) -> (i32, i32) {
    %c0_i32 = arith.constant 0 : i32
    %c0_i32_0 = arith.constant 0 : i32
    return %arg0, %c0_i32 : i32, i32
  }
  func.func @transform_1(%arg0: i32, %arg1: i32) -> (i32, i32) {
    %c0_i32 = arith.constant 0 : i32
    %c0_i32_0 = arith.constant 0 : i32
    return %c0_i32, %arg1 : i32, i32
  }
  func.func @transform_2(%arg0: i32, %arg1: i32) -> (i32, i32) {
    %c0_i32 = arith.constant 0 : i32
    %c0_i32_0 = arith.constant 0 : i32
    return %c0_i32, %arg1 : i32, i32
  }
  func.func @transform_3(%arg0: i32, %arg1: i32) -> (i32, i32) {
    %c0_i32 = arith.constant 0 : i32
    return %arg0, %arg1 : i32, i32
  }
}

</mosaic_0001>

<llo_original>
// kernel: tpu_custom_call.1
$region0: #{tpu_custom_call.1}
  #allocation0 [shape = 'u32[]', space=smem, size = 0x4, offset = 0x4, fixed_abs, tag = 'smem constant byte address 0x4 - core index']
  #allocation1 [shape = 'u32[72,128]{1,0:T(1,128)}', space=vmem, size = 0x9000, scoped, tag = 'internal scratch']
  %s0 = inlined_call_operand.vmem [shape: f32[8,256], index: 0, kind: input, shape index: {}]
  %s1 = inlined_call_operand.vmem [shape: f32[256,16], index: 1, kind: input, shape index: {}]
  %s2 = inlined_call_operand.vmem [shape: f32[1,16], index: 2, kind: input, shape index: {}]
  %s3 = inlined_call_operand.hbm [shape: f32[8,16], index: 3, kind: output, shape index: {}]
  %s4 = sld [smem:[#allocation0]]
  $region22: #{tpu_custom_call.1} parent=0
    _
  %s6 = ssub.s32 1, %s4
  %s7 = scalar_select 0, %s6, %s4
  $region1: #{tpu_custom_call.1} parent=0
    #allocation2 [shape = 'u8[4096]{0}', space=vmem, size = 0x1000, scoped, tag = 'output window, operand 0, single buffered']
    #allocation3 [shape = 's32[1]{0}', space=sflag, size = 0x4, scoped, tag = 'scoped memory for tpu_custom_call.1']
    %8 = vsyncpa [#allocation3], 0
    // Predicated region
    $region2: #{tpu_custom_call.1} parent=1 // pred_check
      _
    $region3: #{tpu_custom_call.1} parent=1 // pred_check_branch
      %10 = sbr.rel (0) target = $region5
    $region4: #{tpu_custom_call.1} parent=1 // pred_region
      _
    $region5: #{tpu_custom_call.1} parent=1 // pred_fallthru
      _
    // Predicated region
    $region6: #{tpu_custom_call.1} parent=1 // pred_check
      _
    $region7: #{tpu_custom_call.1} parent=1 // pred_check_branch
      %12 = sbr.rel (0) target = $region9
    $region8: #{tpu_custom_call.1} parent=1 // pred_region
      _
    $region9: #{tpu_custom_call.1} parent=1 // pred_fallthru
      _
    // Predicated region
    $region10: #{tpu_custom_call.1} parent=1 // pred_check
      _
    $region11: #{tpu_custom_call.1} parent=1 // pred_check_branch
      %14 = sbr.rel (0) target = $region13
    $region12: #{tpu_custom_call.1} parent=1 // pred_region
      _
    $region13: #{tpu_custom_call.1} parent=1 // pred_fallthru
      _
    %v15 = vld [vmem:[%s0] sm:$0xff]
    %v16 = vld [vmem:[%s0 + $0x8] sm:$0xff]
    %v17 = vld [vmem:[%s1] sm:$0xff]
    %v18 = vld [vmem:[%s1 + $0x8] sm:$0xff]
    %v19 = vld [vmem:[%s1 + $0x10] sm:$0xff]
    %v20 = vld [vmem:[%s1 + $0x18] sm:$0xff]
    %v21 = vld [vmem:[%s1 + $0x20] sm:$0xff]
    %v22 = vld [vmem:[%s1 + $0x28] sm:$0xff]
    %v23 = vld [vmem:[%s1 + $0x30] sm:$0xff]
    %v24 = vld [vmem:[%s1 + $0x38] sm:$0xff]
    %v25 = vld [vmem:[%s1 + $0x40] sm:$0xff]
    %v26 = vld [vmem:[%s1 + $0x48] sm:$0xff]
    %v27 = vld [vmem:[%s1 + $0x50] sm:$0xff]
    %v28 = vld [vmem:[%s1 + $0x58] sm:$0xff]
    %v29 = vld [vmem:[%s1 + $0x60] sm:$0xff]
    %v30 = vld [vmem:[%s1 + $0x68] sm:$0xff]
    %v31 = vld [vmem:[%s1 + $0x70] sm:$0xff]
    %v32 = vld [vmem:[%s1 + $0x78] sm:$0xff]
    %v33 = vld [vmem:[%s1 + $0x80] sm:$0xff]
    %v34 = vld [vmem:[%s1 + $0x88] sm:$0xff]
    %v35 = vld [vmem:[%s1 + $0x90] sm:$0xff]
    %v36 = vld [vmem:[%s1 + $0x98] sm:$0xff]
    %v37 = vld [vmem:[%s1 + $0xa0] sm:$0xff]
    %v38 = vld [vmem:[%s1 + $0xa8] sm:$0xff]
    %v39 = vld [vmem:[%s1 + $0xb0] sm:$0xff]
    %v40 = vld [vmem:[%s1 + $0xb8] sm:$0xff]
    %v41 = vld [vmem:[%s1 + $0xc0] sm:$0xff]
    %v42 = vld [vmem:[%s1 + $0xc8] sm:$0xff]
    %v43 = vld [vmem:[%s1 + $0xd0] sm:$0xff]
    %v44 = vld [vmem:[%s1 + $0xd8] sm:$0xff]
    %v45 = vld [vmem:[%s1 + $0xe0] sm:$0xff]
    %v46 = vld [vmem:[%s1 + $0xe8] sm:$0xff]
    %v47 = vld [vmem:[%s1 + $0xf0] sm:$0xff]
    %v48 = vld [vmem:[%s1 + $0xf8] sm:$0xff]
    %v49 = vld [vmem:[%s2] sm:$0x1]
    %v51 = vperm.slane %v49, 0
    %53 = vmatpush.msra.mxu0 %v32
    %54 = vmatpush.msra.mxu0 %v31
    %55 = vmatpush.msra.mxu0 %v30
    %56 = vmatpush.msra.mxu0 %v29
    %57 = vmatpush.msra.mxu0 %v28
    %58 = vmatpush.msra.mxu0 %v27
    %59 = vmatpush.msra.mxu0 %v26
    %60 = vmatpush.msra.mxu0 %v25
    %61 = vmatpush.msra.mxu0 %v24
    %62 = vmatpush.msra.mxu0 %v23
    %63 = vmatpush.msra.mxu0 %v22
    %64 = vmatpush.msra.mxu0 %v21
    %65 = vmatpush.msra.mxu0 %v20
    %66 = vmatpush.msra.mxu0 %v19
    %67 = vmatpush.msra.mxu0 %v18
    %68 = vmatpush.msra.mxu0 %v17
    %69 = vmatmul.f32.gmra.mxu0 %v15
    %v70 = vpop.f32.mrf.mxu0
    %v71 = vadd.f32 %v51, %v70
    %72 = vdwg.mxu0
    %73 = vmatpush.msra.mxu0 %v48
    %74 = vmatpush.msra.mxu0 %v47
    %75 = vmatpush.msra.mxu0 %v46
    %76 = vmatpush.msra.mxu0 %v45
    %77 = vmatpush.msra.mxu0 %v44
    %78 = vmatpush.msra.mxu0 %v43
    %79 = vmatpush.msra.mxu0 %v42
    %80 = vmatpush.msra.mxu0 %v41
    %81 = vmatpush.msra.mxu0 %v40
    %82 = vmatpush.msra.mxu0 %v39
    %83 = vmatpush.msra.mxu0 %v38
    %84 = vmatpush.msra.mxu0 %v37
    %85 = vmatpush.msra.mxu0 %v36
    %86 = vmatpush.msra.mxu0 %v35
    %87 = vmatpush.msra.mxu0 %v34
    %88 = vmatpush.msra.mxu0 %v33
    %89 = vmatmul.f32.gmra.mxu0 %v16
    %v90 = vpop.f32.mrf.mxu0
    %v91 = vadd.f32 %v71, %v90
    %92 = vdwg.mxu0
    %vm93 = vcmask 130048
    %94 = vst.msk [vmem:[#allocation2] sm:$0xff] %vm93, %v91
    // Predicated region
    $region14: #{tpu_custom_call.1} parent=1 // pred_check
      _
    $region15: #{tpu_custom_call.1} parent=1 // pred_check_branch
      %96 = sbr.rel (0) target = $region17
    $region16: #{tpu_custom_call.1} parent=1 // pred_region
      %98 = vsyncadd [#allocation3], 0
      %s100 = sshll.u32 [#allocation2], 4
      %s101 = int_to_ptr.vmem [resolvable:$true] %s100
      %s102 = sshll.u32 %s3, 4
      %s103 = int_to_ptr.hbm [resolvable:$true] %s102
      %105 = dma.vmem_to_hbm [thread:$0]  %s101, 128, %s103, [#allocation3]
    $region17: #{tpu_custom_call.1} parent=1 // pred_fallthru
      _
    // Predicated region
    $region18: #{tpu_custom_call.1} parent=1 // pred_check
      _
    $region19: #{tpu_custom_call.1} parent=1 // pred_check_branch
      %107 = sbr.rel (0) target = $region21
    $region20: #{tpu_custom_call.1} parent=1 // pred_region
      %109 = dma.done [#allocation3], 128
    $region21: #{tpu_custom_call.1} parent=1 // pred_fallthru
      _
    %110 = vsyncpa [#allocation3], 1

</llo_original>
